<compile_context>
chip_gen: v7x
topology: tpu7x:2x2x1
jax: 0.10.0
libtpu: 0.0.40
codegen_flags: <defaults>
</compile_context>

<pallas_src>
import functools

import jax
import jax.numpy as jnp
import numpy as np
from jax import lax
from jax.experimental import pallas as pl
from jax.experimental.pallas import tpu as pltpu

LANE = 128
NEG_INF = -1e9  # bias for padded sensitive-classifier lanes


def _round_up(x, m):
    return ((x + m - 1) // m) * m


def cfair_fused_kernel(x_ref, sel_ref, w_stem_ref, b_stem_ref, w_fc_ref,
                       b_fc_ref, w_adv_ref, b_adv_ref, w_cls_ref, b_cls_ref,
                       out_ref, feat_ref, c_ref, acc_ref,
                       *, inv_s, s_total, s_blk, slice_w, total_rows, a_pad,
                       used_classes):
    """Fused backbone-stem + CFair adversary forward.

    Grid: (batch tiles [parallel], spatial chunks [arbitrary reduction]).
      every s step : VPU-accumulate lane slices of the chunk into a lane-dense
                     f32 VMEM accumulator (tail lanes masked on the last step)
      last s step  : one cross-lane reduce -> pooled means, stem linear ->
                     features, head linear -> class outputs, then the CFair
                     adversary path (relu -> grad_reverse(identity fwd) ->
                     per-class adversary linear + relu -> sensitive classifier
                     -> log_softmax), all stored lane-dense.
    """
    b = pl.program_id(0)
    s = pl.program_id(1)
    last_s = pl.num_programs(1) - 1
    rows = acc_ref.shape[0]            # n_blk * C   (multiple of 8)
    n_slices = s_blk // slice_w

    @pl.when(s == 0)
    def _init():
        acc_ref[...] = jnp.zeros_like(acc_ref)

    def _accumulate(mask_tail):
        if mask_tail:
            lane_iota = lax.broadcasted_iota(jnp.int32, (rows, slice_w), 1)
            lane_base = s * s_blk

        def body(i, acc):
            start = pl.multiple_of(i * slice_w, slice_w)
            v = x_ref[:, pl.ds(start, slice_w)].astype(jnp.float32)
            if mask_tail:
                g = lane_iota + (lane_base + i * slice_w)
                v = jnp.where(g < s_total, v, 0.0)   # garbage tail lanes -> 0
            return acc + v

        acc_ref[...] = lax.fori_loop(0, n_slices, body, acc_ref[...])

    if s_total % s_blk == 0:
        _accumulate(False)                           # no ragged tail at all
    else:
        @pl.when(s != last_s)
        def _full_chunks():
            _accumulate(False)

        @pl.when(s == last_s)
        def _tail_chunk():
            _accumulate(True)

    @pl.when(s == last_s)
    def _finalize():
        # Single cross-lane (XLU) reduce; zero rows past the valid N*C range
        # (OOB rows of the last batch tile hold uninitialised HBM garbage).
        rowsum = jnp.sum(acc_ref[...], axis=1, keepdims=True) * inv_s  # (rows,1)
        r_iota = lax.broadcasted_iota(jnp.int32, (rows, 1), 0)
        valid_rows = total_rows - b * rows
        rowsum = jnp.where(r_iota < valid_rows, rowsum, 0.0)

        # Stem: feat[n,:] = sum_c pooled[n,c] * w_stem[c,:] + b_stem, written
        # as a selector matmul to avoid an in-kernel (rows,1)->(n_blk,C)
        # relayout: wp[r,:] = pooled_flat[r] * w_stem[r % C, :].
        wp = rowsum * w_stem_ref[...]                                   # (rows, Hpad)
        feat = jnp.dot(sel_ref[...], wp,
                       preferred_element_type=jnp.float32) + b_stem_ref[...]
        feat_ref[...] = feat                                            # (n_blk, Hpad)
        out_ref[...] = jnp.dot(feat, w_fc_ref[...],
                               preferred_element_type=jnp.float32) + b_fc_ref[...]

        # CFair adversary path (grad_reverse is the identity in the forward).
        h = jnp.maximum(feat, 0.0)                                      # F.relu(features)
        z = jnp.dot(h, w_adv_ref[...],                                  # both adversaries
                    preferred_element_type=jnp.float32) + b_adv_ref[...]
        z = jnp.maximum(z, 0.0)                                         # (n_blk, uc*Apad)

        for j in range(used_classes):                                   # unrolled (uc == 2)
            zj = z[:, j * a_pad:(j + 1) * a_pad]                        # lane-aligned slice
            logits = jnp.dot(zj, w_cls_ref[j],
                             preferred_element_type=jnp.float32) + b_cls_ref[j]
            # Padded lanes carry a -1e9 bias -> exp underflows to 0; safe as
            # long as real logits stay far above NEG_INF (they do: f32 + max
            # subtraction).
            m = jnp.max(logits, axis=1, keepdims=True)
            lse = jnp.log(jnp.sum(jnp.exp(logits - m), axis=1,
                                  keepdims=True)) + m
            c_ref[j, :, :] = logits - lse                               # log_softmax, dim=1


class CFairNet3DPallas:
    CLS_OUT = 2  # sensitive attribute has 2 classes

    def __init__(self, in_channels, num_classes, hidden_size=32,
                 adversary_size=128, seed=0):
        self.in_channels = in_channels
        self.num_classes = num_classes
        self.used_classes = 2            # matches `self.used_classes = 2` in the spec
        self.hidden_size = hidden_size
        self.adversary_size = adversary_size

        # Lane-dense padded sizes.
        self.h_pad = _round_up(hidden_size, LANE)
        self.nc_pad = _round_up(num_classes, LANE)
        self.a_pad = _round_up(adversary_size, LANE)
        self.cls_pad = _round_up(self.CLS_OUT, LANE)

        ks = jax.random.split(jax.random.PRNGKey(seed), 4)
        sc = 0.02
        Hh, A, uc = hidden_size, adversary_size, self.used_classes

        # "Real" (unpadded) parameters, mirroring the PyTorch module layout.
        self.w_stem = jax.random.normal(ks[0], (in_channels, Hh), jnp.float32) * sc
        self.b_stem = jnp.zeros((Hh,), jnp.float32)
        self.w_fc = jax.random.normal(ks[1], (Hh, num_classes), jnp.float32) * sc
        self.b_fc = jnp.zeros((num_classes,), jnp.float32)
        self.w_adv = jax.random.normal(ks[2], (uc, Hh, A), jnp.float32) * sc
        self.b_adv = jnp.zeros((uc, A), jnp.float32)
        self.w_cls = jax.random.normal(ks[3], (uc, A, self.CLS_OUT), jnp.float32) * sc
        self.b_cls = jnp.zeros((uc, self.CLS_OUT), jnp.float32)

        # Zero-pad / pack everything to lane-dense (8,128)-friendly shapes.
        self.w_stem_p = (jnp.zeros((in_channels, self.h_pad), jnp.float32)
                         .at[:, :Hh].set(self.w_stem))
        self.b_stem_p = (jnp.zeros((1, self.h_pad), jnp.float32)
                         .at[0, :Hh].set(self.b_stem))
        self.w_fc_p = (jnp.zeros((self.h_pad, self.nc_pad), jnp.float32)
                       .at[:Hh, :num_classes].set(self.w_fc))
        self.b_fc_p = (jnp.zeros((1, self.nc_pad), jnp.float32)
                       .at[0, :num_classes].set(self.b_fc))

        # Both adversaries stacked along the output dim -> one (Hpad, uc*Apad)
        # matmul in the kernel.
        w_adv_p = jnp.zeros((self.h_pad, uc * self.a_pad), jnp.float32)
        b_adv_p = jnp.zeros((1, uc * self.a_pad), jnp.float32)
        for j in range(uc):
            w_adv_p = w_adv_p.at[:Hh, j * self.a_pad:j * self.a_pad + A].set(self.w_adv[j])
            b_adv_p = b_adv_p.at[0, j * self.a_pad:j * self.a_pad + A].set(self.b_adv[j])
        self.w_adv_p = w_adv_p
        self.b_adv_p = b_adv_p

        # Sensitive classifiers; padded logit lanes get a -1e9 bias so they
        # drop out of the max-stabilized log_softmax without in-kernel masking.
        self.w_cls_p = (jnp.zeros((uc, self.a_pad, self.cls_pad), jnp.float32)
                        .at[:, :A, :self.CLS_OUT].set(self.w_cls))
        self.b_cls_p = (jnp.full((uc, 1, self.cls_pad), NEG_INF, jnp.float32)
                        .at[:, 0, :self.CLS_OUT].set(self.b_cls))

    # ------------------------------------------------------------------ #

    def _fused_forward(self, x):
        N, C, D, H, W = x.shape
        assert C == self.in_channels
        S = D * H * W
        uc = self.used_classes

        # Dense 2D (N*C, S) view: metadata-only reshape, no cast/pad copy pass
        # (the kernel reads f32 directly and masks the ragged S tail itself).
        x2 = x.reshape(N * C, S)
        if x2.dtype != jnp.float32:
            x2 = x2.astype(jnp.float32)

        # Batch tiling: leading "parallel" grid axis (2 TCs on v7x).
        n_blk = min(_round_up(N, 8), 64)
        n_tiles = pl.cdiv(N, n_blk)
        n_pad = n_tiles * n_blk
        rows_per_tile = n_blk * C        # multiple of 8 -> no sublane padding
        total_rows = N * C

        # Chip-aware VMEM budget: v5e/v6e have 128 MiB physical, v7x only 64.
        try:
            info = pltpu.get_tpu_info()
            vmem_cap = int(getattr(info, "vmem_capacity_bytes", 64 * 1024 * 1024))
        except Exception:
            vmem_cap = 64 * 1024 * 1024
        if vmem_cap >= 128 * 1024 * 1024:     # v5e / v6e
            vmem_limit = 64 * 1024 * 1024
            input_budget = 32 * 1024 * 1024
        else:                                  # v7x (64 MiB physical / 32 scoped)
            vmem_limit = 32 * 1024 * 1024
            input_budget = 12 * 1024 * 1024

        # s_blk sized from the *real* double-buffered f32 block footprint.
        bytes_per_lane_col = rows_per_tile * 4
        s_blk = (input_budget // (2 * bytes_per_lane_col)) // LANE * LANE
        s_blk = max(LANE, min(s_blk, _round_up(S, LANE)))
        if s_blk % 512 == 0:          # wider inner slices amortise loop overhead
            slice_w = 512
        elif s_blk % 256 == 0:
            slice_w = 256
        else:
            slice_w = LANE
        s_tiles = pl.cdiv(S, s_blk)
        grid = (n_tiles, s_tiles)

        # Tiny constants for the selector matmul: sel @ (rowsum * w_stem_big)
        # == pooled(n_blk, C) @ w_stem, with no in-kernel relayout.
        sel = (jnp.arange(rows_per_tile)[None, :] // C
               == jnp.arange(n_blk)[:, None]).astype(jnp.float32)
        w_stem_big = jnp.tile(self.w_stem_p, (n_blk, 1))   # row r -> w_stem[r % C]

        kernel = functools.partial(
            cfair_fused_kernel, inv_s=1.0 / S, s_total=S, s_blk=s_blk,
            slice_w=slice_w, total_rows=total_rows, a_pad=self.a_pad,
            used_classes=uc)

        weight_bytes = sum(int(w.size) * 4 for w in (
            sel, w_stem_big, self.b_stem_p, self.w_fc_p, self.b_fc_p,
            self.w_adv_p, self.b_adv_p, self.w_cls_p, self.b_cls_p))
        out_bytes = 4 * n_pad * (self.nc_pad + self.h_pad + uc * self.cls_pad)
        flops = int(2 * total_rows * S
                    + 2 * n_pad * (C * self.h_pad
                                   + self.h_pad * self.nc_pad
                                   + self.h_pad * uc * self.a_pad
                                   + uc * self.a_pad * self.cls_pad))
        cost = pl.CostEstimate(
            flops=flops,
            transcendentals=int(n_pad * uc * self.cls_pad),
            bytes_accessed=int(x2.size * 4 + weight_bytes + out_bytes))

        c2 = lambda b, s: (0, 0)
        c3 = lambda b, s: (0, 0, 0)

        out_pad, feat_pad, c_pad = pl.pallas_call(
            kernel,
            out_shape=(
                jax.ShapeDtypeStruct((n_pad, self.nc_pad), jnp.float32),
                jax.ShapeDtypeStruct((n_pad, self.h_pad), jnp.float32),
                jax.ShapeDtypeStruct((uc, n_pad, self.cls_pad), jnp.float32),
            ),
            grid_spec=pltpu.PrefetchScalarGridSpec(
                num_scalar_prefetch=0,
                grid=grid,
                in_specs=[
                    pl.BlockSpec((rows_per_tile, s_blk), lambda b, s: (b, s)),
                    pl.BlockSpec((n_blk, rows_per_tile), c2),
                    pl.BlockSpec((rows_per_tile, self.h_pad), c2),
                    pl.BlockSpec((1, self.h_pad), c2),
                    pl.BlockSpec((self.h_pad, self.nc_pad), c2),
                    pl.BlockSpec((1, self.nc_pad), c2),
                    pl.BlockSpec((self.h_pad, uc * self.a_pad), c2),
                    pl.BlockSpec((1, uc * self.a_pad), c2),
                    pl.BlockSpec((uc, self.a_pad, self.cls_pad), c3),
                    pl.BlockSpec((uc, 1, self.cls_pad), c3),
                ],
                out_specs=[
                    pl.BlockSpec((n_blk, self.nc_pad), lambda b, s: (b, 0)),
                    pl.BlockSpec((n_blk, self.h_pad), lambda b, s: (b, 0)),
                    pl.BlockSpec((uc, n_blk, self.cls_pad), lambda b, s: (0, b, 0)),
                ],
                scratch_shapes=[pltpu.VMEM((rows_per_tile, slice_w), jnp.float32)],
            ),
            compiler_params=pltpu.CompilerParams(
                dimension_semantics=("parallel", "arbitrary"),
                vmem_limit_bytes=vmem_limit,
            ),
            cost_estimate=cost,
        )(x2, sel, w_stem_big, self.b_stem_p, self.w_fc_p, self.b_fc_p,
          self.w_adv_p, self.b_adv_p, self.w_cls_p, self.b_cls_p)

        outputs = out_pad[:N, :self.num_classes]
        features = feat_pad[:N, :self.hidden_size]
        c_all = c_pad[:, :N, :self.CLS_OUT]
        return outputs, features, c_all

    # ------------------------------------------------------------------ #

    def _reference_forward(self, x):
        """Pure-JAX reference of the same math (for the correctness check)."""
        N, C = x.shape[0], x.shape[1]
        pooled = jnp.mean(x.astype(jnp.float32).reshape(N, C, -1), axis=-1)
        feat = pooled @ self.w_stem + self.b_stem
        out = feat @ self.w_fc + self.b_fc
        h = jnp.maximum(feat, 0.0)
        cs = []
        for j in range(self.used_classes):
            zj = jnp.maximum(h @ self.w_adv[j] + self.b_adv[j], 0.0)
            lg = zj @ self.w_cls[j] + self.b_cls[j]
            cs.append(jax.nn.log_softmax(lg, axis=1))
        return out, feat, cs

    # ------------------------------------------------------------------ #

    def forward(self, inputs, labels=None):
        outputs, features, c_all = self._fused_forward(inputs)
        if labels is None:
            return outputs, features
        # TODO(synk): PyTorch gathers h_relu[labels[:, 0] == j] (dynamic shape);
        # no static-shape Pallas equivalent exists, so each class's log_softmax
        # is returned for ALL rows together with the boolean selection mask.
        c_losses = [(c_all[j], labels[:, 0] == j)
                    for j in range(self.used_classes)]
        return outputs, c_losses

    def inference(self, inputs):
        outputs, features, _ = self._fused_forward(inputs)
        return outputs, features


if __name__ == "__main__":
    key = jax.random.PRNGKey(0)
    kx, _ = jax.random.split(key)
    N, C, D, H, W = 4, 3, 4, 8, 8
    x = jax.random.normal(kx, (N, C, D, H, W), jnp.float32)
    labels = jnp.array([[0], [1], [0], [1]], jnp.int32)

    model = CFairNet3DPallas(in_channels=C, num_classes=4,
                             hidden_size=32, adversary_size=128, seed=0)

    # inference path (labels is None): (outputs, features)
    outputs, features = model.forward(x)
    # training path (with labels): (outputs, c_losses)
    outputs2, c_losses = model.forward(x, labels)

    for arr in (outputs, features, outputs2):
        jax.block_until_ready(arr)
    for cl, mask in c_losses:
        jax.block_until_ready(cl)
        jax.block_until_ready(mask)

    # Silent correctness check against the pure-JAX reference (f32 end-to-end).
    ref_out, ref_feat, ref_c = model._reference_forward(x)
    np.testing.assert_allclose(np.asarray(outputs), np.asarray(ref_out),
                               rtol=1e-3, atol=1e-4)
    np.testing.assert_allclose(np.asarray(features), np.asarray(ref_feat),
                               rtol=1e-3, atol=1e-4)
    for j, (cl, _) in enumerate(c_losses):
        np.testing.assert_allclose(np.asarray(cl), np.asarray(ref_c[j]),
                                   rtol=1e-3, atol=1e-4)

    print("KERNEL_OK")
</pallas_src>

<mosaic_0001>
module attributes {stable_mosaic.version = 11 : i64} {
  func.func @cfair_fused_kernel(%arg0: i32, %arg1: i32, %arg2: memref<24x256xf32, #tpu.memory_space<vmem>>, %arg3: memref<8x24xf32, #tpu.memory_space<vmem>>, %arg4: memref<24x128xf32, #tpu.memory_space<vmem>>, %arg5: memref<1x128xf32, #tpu.memory_space<vmem>>, %arg6: memref<128x128xf32, #tpu.memory_space<vmem>>, %arg7: memref<1x128xf32, #tpu.memory_space<vmem>>, %arg8: memref<128x256xf32, #tpu.memory_space<vmem>>, %arg9: memref<1x256xf32, #tpu.memory_space<vmem>>, %arg10: memref<2x128x128xf32, #tpu.memory_space<vmem>>, %arg11: memref<2x1x128xf32, #tpu.memory_space<vmem>>, %arg12: memref<8x128xf32, #tpu.memory_space<vmem>>, %arg13: memref<8x128xf32, #tpu.memory_space<vmem>>, %arg14: memref<2x8x128xf32, #tpu.memory_space<vmem>>, %arg15: memref<24x256xf32, #tpu.memory_space<vmem>>) attributes {dimension_semantics = [#tpu.dimension_semantics<parallel>, #tpu.dimension_semantics<arbitrary>], iteration_bounds = array<i64: 1, 1>, scalar_prefetch = 0 : i64, scratch_operands = 1 : i64, tpu.core_type = #tpu.core_type<tc>, window_params = [{transform_indices = @transform_0, window_bounds = array<i64: 24, 256>}, {pipeline_mode = #tpu.pipeline_mode<synchronous>, transform_indices = @transform_1, window_bounds = array<i64: 8, 24>}, {pipeline_mode = #tpu.pipeline_mode<synchronous>, transform_indices = @transform_2, window_bounds = array<i64: 24, 128>}, {pipeline_mode = #tpu.pipeline_mode<synchronous>, transform_indices = @transform_3, window_bounds = array<i64: 1, 128>}, {pipeline_mode = #tpu.pipeline_mode<synchronous>, transform_indices = @transform_4, window_bounds = array<i64: 128, 128>}, {pipeline_mode = #tpu.pipeline_mode<synchronous>, transform_indices = @transform_5, window_bounds = array<i64: 1, 128>}, {pipeline_mode = #tpu.pipeline_mode<synchronous>, transform_indices = @transform_6, window_bounds = array<i64: 128, 256>}, {pipeline_mode = #tpu.pipeline_mode<synchronous>, transform_indices = @transform_7, window_bounds = array<i64: 1, 256>}, {pipeline_mode = #tpu.pipeline_mode<synchronous>, transform_indices = @transform_8, window_bounds = array<i64: 2, 128, 128>}, {pipeline_mode = #tpu.pipeline_mode<synchronous>, transform_indices = @transform_9, window_bounds = array<i64: 2, 1, 128>}, {transform_indices = @transform_10, window_bounds = array<i64: 8, 128>}, {transform_indices = @transform_11, window_bounds = array<i64: 8, 128>}, {transform_indices = @transform_12, window_bounds = array<i64: 2, 8, 128>}]} {
    %c0_i32 = arith.constant 0 : i32
    %0 = arith.cmpi eq, %arg1, %c0_i32 : i32
    %1 = arith.extui %0 : i1 to i32
    %c0_i32_0 = arith.constant 0 : i32
    %2 = arith.cmpi ne, %1, %c0_i32_0 : i32
    scf.if %2 {
      %cst = arith.constant 0.000000e+00 : f32
      %13 = vector.broadcast %cst : f32 to vector<24x256xf32>
      %c0_8 = arith.constant 0 : index
      %c0_9 = arith.constant 0 : index
      %14 = vector.load %arg15[%c0_8, %c0_9] : memref<24x256xf32, #tpu.memory_space<vmem>>, vector<24x256xf32>
      tpu.vector_store %arg15[%c0_8, %c0_9], %13 {strides = array<i32>} : memref<24x256xf32, #tpu.memory_space<vmem>>, vector<24x256xf32>,
    } else {
    }
    %c0 = arith.constant 0 : index
    %c0_1 = arith.constant 0 : index
    %3 = vector.load %arg15[%c0, %c0_1] : memref<24x256xf32, #tpu.memory_space<vmem>>, vector<24x256xf32>
    %c0_i32_2 = arith.constant 0 : i32
    %c256_i32 = arith.constant 256 : i32
    %4 = arith.muli %c0_i32_2, %c256_i32 : i32
    %5 = tpu.assume_multiple %4, 256 : i32
    %c0_3 = arith.constant 0 : index
    %6 = arith.index_cast %5 : i32 to index
    %7 = vector.load %arg2[%c0_3, %6] : memref<24x256xf32, #tpu.memory_space<vmem>>, vector<24x256xf32>
    %8 = arith.addf %3, %7 : vector<24x256xf32>
    %c1_i32 = arith.constant 1 : i32
    %c0_4 = arith.constant 0 : index
    %c0_5 = arith.constant 0 : index
    %9 = vector.load %arg15[%c0_4, %c0_5] : memref<24x256xf32, #tpu.memory_space<vmem>>, vector<24x256xf32>
    tpu.vector_store %arg15[%c0_4, %c0_5], %8 {strides = array<i32>} : memref<24x256xf32, #tpu.memory_space<vmem>>, vector<24x256xf32>,
    %c0_i32_6 = arith.constant 0 : i32
    %10 = arith.cmpi eq, %arg1, %c0_i32_6 : i32
    %11 = arith.extui %10 : i1 to i32
    %c0_i32_7 = arith.constant 0 : i32
    %12 = arith.cmpi ne, %11, %c0_i32_7 : i32
    scf.if %12 {
      %c0_8 = arith.constant 0 : index
      %c0_9 = arith.constant 0 : index
      %13 = vector.load %arg15[%c0_8, %c0_9] : memref<24x256xf32, #tpu.memory_space<vmem>>, vector<24x256xf32>
      %cst = arith.constant dense<0.000000e+00> : vector<24xf32>
      %14 = vector.multi_reduction <add>, %13, %cst [1] : vector<24x256xf32> to vector<24xf32>
      %15 = vector.shape_cast %14 : vector<24xf32> to vector<24x1xf32>
      %cst_10 = arith.constant 3.906250e-03 : f32
      %16 = vector.broadcast %cst_10 : f32 to vector<24x1xf32>
      %17 = arith.mulf %15, %16 : vector<24x1xf32>
      %18 = tpu.iota {dimensions = array<i32: 0>} : vector<24x1xi32>
      %c24_i32 = arith.constant 24 : i32
      %19 = arith.muli %arg0, %c24_i32 : i32
      %c12_i32 = arith.constant 12 : i32
      %20 = arith.subi %c12_i32, %19 : i32
      %21 = vector.broadcast %20 : i32 to vector<24x1xi32>
      %22 = arith.cmpi slt, %18, %21 : vector<24x1xi32>
      %cst_11 = arith.constant 0.000000e+00 : f32
      %23 = vector.broadcast %cst_11 : f32 to vector<24x1xf32>
      %24 = arith.select %22, %17, %23 : vector<24x1xi1>, vector<24x1xf32>
      %c0_12 = arith.constant 0 : index
      %c0_13 = arith.constant 0 : index
      %25 = vector.load %arg4[%c0_12, %c0_13] : memref<24x128xf32, #tpu.memory_space<vmem>>, vector<24x128xf32>
      %26 = vector.broadcast %24 : vector<24x1xf32> to vector<24x128xf32>
      %27 = arith.mulf %26, %25 : vector<24x128xf32>
      %c0_14 = arith.constant 0 : index
      %c0_15 = arith.constant 0 : index
      %28 = vector.load %arg3[%c0_14, %c0_15] : memref<8x24xf32, #tpu.memory_space<vmem>>, vector<8x24xf32>
      %cst_16 = arith.constant dense<0.000000e+00> : vector<8x128xf32>
      %29 = tpu.matmul %28, %27, %cst_16 {dimension_numbers = #tpu.dot_dimension_numbers<[1], [0], [0], [1], [0, 0, 1, 1], [], []>} : vector<8x24xf32>, vector<24x128xf32>, vector<8x128xf32> -> vector<8x128xf32>
      %c0_17 = arith.constant 0 : index
      %c0_18 = arith.constant 0 : index
      %30 = vector.load %arg5[%c0_17, %c0_18] : memref<1x128xf32, #tpu.memory_space<vmem>>, vector<1x128xf32>
      %31 = vector.broadcast %30 : vector<1x128xf32> to vector<8x128xf32>
      %32 = arith.addf %29, %31 : vector<8x128xf32>
      %c0_19 = arith.constant 0 : index
      %c0_20 = arith.constant 0 : index
      %33 = vector.load %arg13[%c0_19, %c0_20] : memref<8x128xf32, #tpu.memory_space<vmem>>, vector<8x128xf32>
      tpu.vector_store %arg13[%c0_19, %c0_20], %32 {strides = array<i32>} : memref<8x128xf32, #tpu.memory_space<vmem>>, vector<8x128xf32>,
      %c0_21 = arith.constant 0 : index
      %c0_22 = arith.constant 0 : index
      %34 = vector.load %arg6[%c0_21, %c0_22] : memref<128x128xf32, #tpu.memory_space<vmem>>, vector<128x128xf32>
      %cst_23 = arith.constant dense<0.000000e+00> : vector<8x128xf32>
      %35 = tpu.matmul %32, %34, %cst_23 {dimension_numbers = #tpu.dot_dimension_numbers<[1], [0], [0], [1], [0, 0, 1, 1], [], []>} : vector<8x128xf32>, vector<128x128xf32>, vector<8x128xf32> -> vector<8x128xf32>
      %c0_24 = arith.constant 0 : index
      %c0_25 = arith.constant 0 : index
      %36 = vector.load %arg7[%c0_24, %c0_25] : memref<1x128xf32, #tpu.memory_space<vmem>>, vector<1x128xf32>
      %37 = vector.broadcast %36 : vector<1x128xf32> to vector<8x128xf32>
      %38 = arith.addf %35, %37 : vector<8x128xf32>
      %c0_26 = arith.constant 0 : index
      %c0_27 = arith.constant 0 : index
      %39 = vector.load %arg12[%c0_26, %c0_27] : memref<8x128xf32, #tpu.memory_space<vmem>>, vector<8x128xf32>
      tpu.vector_store %arg12[%c0_26, %c0_27], %38 {strides = array<i32>} : memref<8x128xf32, #tpu.memory_space<vmem>>, vector<8x128xf32>,
      %cst_28 = arith.constant 0.000000e+00 : f32
      %40 = vector.broadcast %cst_28 : f32 to vector<8x128xf32>
      %41 = arith.maximumf %32, %40 : vector<8x128xf32>
      %c0_29 = arith.constant 0 : index
      %c0_30 = arith.constant 0 : index
      %42 = vector.load %arg8[%c0_29, %c0_30] : memref<128x256xf32, #tpu.memory_space<vmem>>, vector<128x256xf32>
      %cst_31 = arith.constant dense<0.000000e+00> : vector<8x256xf32>
      %43 = tpu.matmul %41, %42, %cst_31 {dimension_numbers = #tpu.dot_dimension_numbers<[1], [0], [0], [1], [0, 0, 1, 1], [], []>} : vector<8x128xf32>, vector<128x256xf32>, vector<8x256xf32> -> vector<8x256xf32>
      %c0_32 = arith.constant 0 : index
      %c0_33 = arith.constant 0 : index
      %44 = vector.load %arg9[%c0_32, %c0_33] : memref<1x256xf32, #tpu.memory_space<vmem>>, vector<1x256xf32>
      %45 = vector.broadcast %44 : vector<1x256xf32> to vector<8x256xf32>
      %46 = arith.addf %43, %45 : vector<8x256xf32>
      %cst_34 = arith.constant 0.000000e+00 : f32
      %47 = vector.broadcast %cst_34 : f32 to vector<8x256xf32>
      %48 = arith.maximumf %46, %47 : vector<8x256xf32>
      %49 = vector.extract_strided_slice %48 {offsets = [0, 0], sizes = [8, 128], strides = [1, 1]} : vector<8x256xf32> to vector<8x128xf32>
      %c0_35 = arith.constant 0 : index
      %c0_36 = arith.constant 0 : index
      %c0_37 = arith.constant 0 : index
      %50 = vector.load %arg10[%c0_35, %c0_36, %c0_37] : memref<2x128x128xf32, #tpu.memory_space<vmem>>, vector<1x128x128xf32>
      %51 = vector.shape_cast %50 : vector<1x128x128xf32> to vector<128x128xf32>
      %cst_38 = arith.constant dense<0.000000e+00> : vector<8x128xf32>
      %52 = tpu.matmul %49, %51, %cst_38 {dimension_numbers = #tpu.dot_dimension_numbers<[1], [0], [0], [1], [0, 0, 1, 1], [], []>} : vector<8x128xf32>, vector<128x128xf32>, vector<8x128xf32> -> vector<8x128xf32>
      %c0_39 = arith.constant 0 : index
      %c0_40 = arith.constant 0 : index
      %c0_41 = arith.constant 0 : index
      %53 = vector.load %arg11[%c0_39, %c0_40, %c0_41] : memref<2x1x128xf32, #tpu.memory_space<vmem>>, vector<1x1x128xf32>
      %54 = vector.shape_cast %53 : vector<1x1x128xf32> to vector<1x128xf32>
      %55 = vector.broadcast %54 : vector<1x128xf32> to vector<8x128xf32>
      %56 = arith.addf %52, %55 : vector<8x128xf32>
      %cst_42 = arith.constant dense<0xFF800000> : vector<8xf32>
      %57 = vector.multi_reduction <maximumf>, %56, %cst_42 [1] : vector<8x128xf32> to vector<8xf32>
      %58 = vector.shape_cast %57 : vector<8xf32> to vector<8x1xf32>
      %59 = vector.broadcast %58 : vector<8x1xf32> to vector<8x128xf32>
      %60 = arith.subf %56, %59 : vector<8x128xf32>
      %61 = math.exp %60 : vector<8x128xf32>
      %cst_43 = arith.constant dense<0.000000e+00> : vector<8xf32>
      %62 = vector.multi_reduction <add>, %61, %cst_43 [1] : vector<8x128xf32> to vector<8xf32>
      %63 = vector.shape_cast %62 : vector<8xf32> to vector<8x1xf32>
      %64 = math.log %63 : vector<8x1xf32>
      %65 = arith.addf %64, %58 : vector<8x1xf32>
      %66 = vector.broadcast %65 : vector<8x1xf32> to vector<8x128xf32>
      %67 = arith.subf %56, %66 : vector<8x128xf32>
      %c0_44 = arith.constant 0 : index
      %c0_45 = arith.constant 0 : index
      %c0_46 = arith.constant 0 : index
      %68 = vector.load %arg14[%c0_44, %c0_45, %c0_46] : memref<2x8x128xf32, #tpu.memory_space<vmem>>, vector<1x8x128xf32>
      %69 = vector.shape_cast %68 : vector<1x8x128xf32> to vector<8x128xf32>
      %70 = vector.shape_cast %67 : vector<8x128xf32> to vector<1x8x128xf32>
      tpu.vector_store %arg14[%c0_44, %c0_45, %c0_46], %70 {strides = array<i32>} : memref<2x8x128xf32, #tpu.memory_space<vmem>>, vector<1x8x128xf32>,
      %71 = vector.extract_strided_slice %48 {offsets = [0, 128], sizes = [8, 128], strides = [1, 1]} : vector<8x256xf32> to vector<8x128xf32>
      %c1 = arith.constant 1 : index
      %c0_47 = arith.constant 0 : index
      %c0_48 = arith.constant 0 : index
      %72 = vector.load %arg10[%c1, %c0_47, %c0_48] : memref<2x128x128xf32, #tpu.memory_space<vmem>>, vector<1x128x128xf32>
      %73 = vector.shape_cast %72 : vector<1x128x128xf32> to vector<128x128xf32>
      %cst_49 = arith.constant dense<0.000000e+00> : vector<8x128xf32>
      %74 = tpu.matmul %71, %73, %cst_49 {dimension_numbers = #tpu.dot_dimension_numbers<[1], [0], [0], [1], [0, 0, 1, 1], [], []>} : vector<8x128xf32>, vector<128x128xf32>, vector<8x128xf32> -> vector<8x128xf32>
      %c1_50 = arith.constant 1 : index
      %c0_51 = arith.constant 0 : index
      %c0_52 = arith.constant 0 : index
      %75 = vector.load %arg11[%c1_50, %c0_51, %c0_52] : memref<2x1x128xf32, #tpu.memory_space<vmem>>, vector<1x1x128xf32>
      %76 = vector.shape_cast %75 : vector<1x1x128xf32> to vector<1x128xf32>
      %77 = vector.broadcast %76 : vector<1x128xf32> to vector<8x128xf32>
      %78 = arith.addf %74, %77 : vector<8x128xf32>
      %cst_53 = arith.constant dense<0xFF800000> : vector<8xf32>
      %79 = vector.multi_reduction <maximumf>, %78, %cst_53 [1] : vector<8x128xf32> to vector<8xf32>
      %80 = vector.shape_cast %79 : vector<8xf32> to vector<8x1xf32>
      %81 = vector.broadcast %80 : vector<8x1xf32> to vector<8x128xf32>
      %82 = arith.subf %78, %81 : vector<8x128xf32>
      %83 = math.exp %82 : vector<8x128xf32>
      %cst_54 = arith.constant dense<0.000000e+00> : vector<8xf32>
      %84 = vector.multi_reduction <add>, %83, %cst_54 [1] : vector<8x128xf32> to vector<8xf32>
      %85 = vector.shape_cast %84 : vector<8xf32> to vector<8x1xf32>
      %86 = math.log %85 : vector<8x1xf32>
      %87 = arith.addf %86, %80 : vector<8x1xf32>
      %88 = vector.broadcast %87 : vector<8x1xf32> to vector<8x128xf32>
      %89 = arith.subf %78, %88 : vector<8x128xf32>
      %c1_55 = arith.constant 1 : index
      %c0_56 = arith.constant 0 : index
      %c0_57 = arith.constant 0 : index
      %90 = vector.load %arg14[%c1_55, %c0_56, %c0_57] : memref<2x8x128xf32, #tpu.memory_space<vmem>>, vector<1x8x128xf32>
      %91 = vector.shape_cast %90 : vector<1x8x128xf32> to vector<8x128xf32>
      %92 = vector.shape_cast %89 : vector<8x128xf32> to vector<1x8x128xf32>
      tpu.vector_store %arg14[%c1_55, %c0_56, %c0_57], %92 {strides = array<i32>} : memref<2x8x128xf32, #tpu.memory_space<vmem>>, vector<1x8x128xf32>,
    } else {
    }
    return
  }
  func.func @transform_0(%arg0: i32, %arg1: i32) -> (i32, i32) {
    %c0_i32 = arith.constant 0 : i32
    return %arg0, %arg1 : i32, i32
  }
  func.func @transform_1(%arg0: i32, %arg1: i32) -> (i32, i32) {
    %c0_i32 = arith.constant 0 : i32
    %c0_i32_0 = arith.constant 0 : i32
    %c0_i32_1 = arith.constant 0 : i32
    return %c0_i32, %c0_i32_0 : i32, i32
  }
  func.func @transform_2(%arg0: i32, %arg1: i32) -> (i32, i32) {
    %c0_i32 = arith.constant 0 : i32
    %c0_i32_0 = arith.constant 0 : i32
    %c0_i32_1 = arith.constant 0 : i32
    return %c0_i32, %c0_i32_0 : i32, i32
  }
  func.func @transform_3(%arg0: i32, %arg1: i32) -> (i32, i32) {
    %c0_i32 = arith.constant 0 : i32
    %c0_i32_0 = arith.constant 0 : i32
    %c0_i32_1 = arith.constant 0 : i32
    return %c0_i32, %c0_i32_0 : i32, i32
  }
  func.func @transform_4(%arg0: i32, %arg1: i32) -> (i32, i32) {
    %c0_i32 = arith.constant 0 : i32
    %c0_i32_0 = arith.constant 0 : i32
    %c0_i32_1 = arith.constant 0 : i32
    return %c0_i32, %c0_i32_0 : i32, i32
  }
  func.func @transform_5(%arg0: i32, %arg1: i32) -> (i32, i32) {
    %c0_i32 = arith.constant 0 : i32
    %c0_i32_0 = arith.constant 0 : i32
    %c0_i32_1 = arith.constant 0 : i32
    return %c0_i32, %c0_i32_0 : i32, i32
  }
  func.func @transform_6(%arg0: i32, %arg1: i32) -> (i32, i32) {
    %c0_i32 = arith.constant 0 : i32
    %c0_i32_0 = arith.constant 0 : i32
    %c0_i32_1 = arith.constant 0 : i32
    return %c0_i32, %c0_i32_0 : i32, i32
  }
  func.func @transform_7(%arg0: i32, %arg1: i32) -> (i32, i32) {
    %c0_i32 = arith.constant 0 : i32
    %c0_i32_0 = arith.constant 0 : i32
    %c0_i32_1 = arith.constant 0 : i32
    return %c0_i32, %c0_i32_0 : i32, i32
  }
  func.func @transform_8(%arg0: i32, %arg1: i32) -> (i32, i32, i32) {
    %c0_i32 = arith.constant 0 : i32
    %c0_i32_0 = arith.constant 0 : i32
    %c0_i32_1 = arith.constant 0 : i32
    %c0_i32_2 = arith.constant 0 : i32
    return %c0_i32, %c0_i32_0, %c0_i32_1 : i32, i32, i32
  }
  func.func @transform_9(%arg0: i32, %arg1: i32) -> (i32, i32, i32) {
    %c0_i32 = arith.constant 0 : i32
    %c0_i32_0 = arith.constant 0 : i32
    %c0_i32_1 = arith.constant 0 : i32
    %c0_i32_2 = arith.constant 0 : i32
    return %c0_i32, %c0_i32_0, %c0_i32_1 : i32, i32, i32
  }
  func.func @transform_10(%arg0: i32, %arg1: i32) -> (i32, i32) {
    %c0_i32 = arith.constant 0 : i32
    %c0_i32_0 = arith.constant 0 : i32
    return %arg0, %c0_i32 : i32, i32
  }
  func.func @transform_11(%arg0: i32, %arg1: i32) -> (i32, i32) {
    %c0_i32 = arith.constant 0 : i32
    %c0_i32_0 = arith.constant 0 : i32
    return %arg0, %c0_i32 : i32, i32
  }
  func.func @transform_12(%arg0: i32, %arg1: i32) -> (i32, i32, i32) {
    %c0_i32 = arith.constant 0 : i32
    %c0_i32_0 = arith.constant 0 : i32
    %c0_i32_1 = arith.constant 0 : i32
    return %c0_i32, %arg0, %c0_i32_0 : i32, i32, i32
  }
}

</mosaic_0001>

<llo_original>
// kernel: tpu_custom_call.1
$region0: #{tpu_custom_call.1}
  #allocation0 [shape = 'u32[]', space=smem, size = 0x4, offset = 0x4, fixed_abs, tag = 'smem constant byte address 0x4 - core index']
  #allocation1 [shape = 'u32[144,128]{1,0:T(1,128)}', space=vmem, size = 0x12000, scoped, tag = 'internal scratch']
  #allocation2 [shape = 'f32[24,256]{1,0:T(8,128)}', space=vmem, size = 0x6000, scoped, tag = 'scratch operand']
  %s0 = inlined_call_operand.hbm [shape: f32[12,256], index: 0, kind: input, shape index: {}]
  %s1 = inlined_call_operand.hbm [shape: f32[8,24], index: 1, kind: input, shape index: {}]
  %s2 = inlined_call_operand.hbm [shape: f32[24,128], index: 2, kind: input, shape index: {}]
  %s3 = inlined_call_operand.vmem [shape: f32[1,128], index: 3, kind: input, shape index: {}]
  %s4 = inlined_call_operand.hbm [shape: f32[128,128], index: 4, kind: input, shape index: {}]
  %s5 = inlined_call_operand.vmem [shape: f32[1,128], index: 5, kind: input, shape index: {}]
  %s6 = inlined_call_operand.hbm [shape: f32[128,256], index: 6, kind: input, shape index: {}]
  %s7 = inlined_call_operand.vmem [shape: f32[1,256], index: 7, kind: input, shape index: {}]
  %s8 = inlined_call_operand.hbm [shape: f32[2,128,128], index: 8, kind: input, shape index: {}]
  %s9 = inlined_call_operand.vmem [shape: f32[2,1,128], index: 9, kind: input, shape index: {}]
  %s10 = inlined_call_operand.hbm [shape: f32[8,128], index: 10, kind: output, shape index: {0}]
  %s11 = inlined_call_operand.hbm [shape: f32[8,128], index: 11, kind: output, shape index: {1}]
  %s12 = inlined_call_operand.hbm [shape: f32[2,8,128], index: 12, kind: output, shape index: {2}]
  %13 = xla_tuple %s10, %s11, %s12
  %s14 = sld [smem:[#allocation0]]
  $region98: #{tpu_custom_call.1} parent=0
    _
  %s16 = ssub.s32 1, %s14
  %s17 = scalar_select 0, %s16, %s14
  $region1: #{tpu_custom_call.1} parent=0
    #allocation3 [shape = 'u8[24576]{0}', space=vmem, size = 0x6000, scoped, tag = 'input window, operand 0, single buffered']
    #allocation4 [shape = 's32[1]{0}', space=sflag, size = 0x4, scoped, tag = 'scoped memory for tpu_custom_call.1']
    #allocation5 [shape = 's32[1]{0}', space=sflag, size = 0x4, scoped, tag = 'scoped memory for tpu_custom_call.1']
    #allocation6 [shape = 'u8[4096]{0}', space=vmem, size = 0x1000, scoped, tag = 'input window, operand 1, single buffered']
    #allocation7 [shape = 's32[1]{0}', space=sflag, size = 0x4, scoped, tag = 'scoped memory for tpu_custom_call.1']
    #allocation8 [shape = 'u8[12288]{0}', space=vmem, size = 0x3000, scoped, tag = 'input window, operand 2, single buffered']
    #allocation9 [shape = 'u8[65536]{0}', space=vmem, size = 0x10000, scoped, tag = 'input window, operand 4, single buffered']
    #allocation10 [shape = 's32[1]{0}', space=sflag, size = 0x4, scoped, tag = 'scoped memory for tpu_custom_call.1']
    #allocation11 [shape = 'u8[131072]{0}', space=vmem, size = 0x20000, scoped, tag = 'input window, operand 6, single buffered']
    #allocation12 [shape = 'u8[131072]{0}', space=vmem, size = 0x20000, scoped, tag = 'input window, operand 8, single buffered']
    #allocation13 [shape = 's32[1]{0}', space=sflag, size = 0x4, scoped, tag = 'scoped memory for tpu_custom_call.1']
    #allocation14 [shape = 'u8[4096]{0}', space=vmem, size = 0x1000, scoped, tag = 'output window, operand 0, single buffered']
    #allocation15 [shape = 'u8[4096]{0}', space=vmem, size = 0x1000, scoped, tag = 'output window, operand 1, single buffered']
    #allocation16 [shape = 's32[1]{0}', space=sflag, size = 0x4, scoped, tag = 'scoped memory for tpu_custom_call.1']
    #allocation17 [shape = 'u8[8192]{0}', space=vmem, size = 0x2000, scoped, tag = 'output window, operand 2, single buffered']
    %18 = vsyncpa [#allocation4], 0
    %19 = vsyncpa [#allocation7], 0
    %20 = vsyncpa [#allocation10], 0
    %21 = vsyncpa [#allocation13], 0
    %22 = vsyncpa [#allocation5], 0
    %23 = vsyncpa [#allocation16], 0
    // Predicated region
    $region2: #{tpu_custom_call.1} parent=1 // pred_check
      _
    $region3: #{tpu_custom_call.1} parent=1 // pred_check_branch
      %25 = sbr.rel (0) target = $region5
    $region4: #{tpu_custom_call.1} parent=1 // pred_region
      %s27 = ssub.s32 768, 512
      %28 = vsyncadd [#allocation4], %s27
      %s29 = sshll.u32 [#allocation3], 4
      %s30 = int_to_ptr.vmem [resolvable:$true] %s29
      %35 = dma.hbm_to_vmem [thread:$0]  %s0, 512, %s30, [#allocation4], 256, 256, 16
    $region5: #{tpu_custom_call.1} parent=1 // pred_fallthru
      _
    // Predicated region
    $region6: #{tpu_custom_call.1} parent=1 // pred_check
      _
    $region7: #{tpu_custom_call.1} parent=1 // pred_check_branch
      %37 = sbr.rel (0) target = $region9
    $region8: #{tpu_custom_call.1} parent=1 // pred_region
      %s39 = ssub.s32 128, 128
      %40 = vsyncadd [#allocation7], %s39
      %s42 = sshll.u32 [#allocation6], 4
      %s43 = int_to_ptr.vmem [resolvable:$true] %s42
      %45 = dma.hbm_to_vmem [thread:$0]  %s1, 128, %s43, [#allocation7]
    $region9: #{tpu_custom_call.1} parent=1 // pred_fallthru
      _
    // Predicated region
    $region10: #{tpu_custom_call.1} parent=1 // pred_check
      _
    $region11: #{tpu_custom_call.1} parent=1 // pred_check_branch
      %47 = sbr.rel (0) target = $region13
    $region12: #{tpu_custom_call.1} parent=1 // pred_region
      %s49 = ssub.s32 384, 384
      %50 = vsyncadd [#allocation7], %s49
      %s51 = sshll.u32 [#allocation8], 4
      %s52 = int_to_ptr.vmem [resolvable:$true] %s51
      %57 = dma.hbm_to_vmem [thread:$0]  %s2, 384, %s52, [#allocation7], 128, 128, 8
    $region13: #{tpu_custom_call.1} parent=1 // pred_fallthru
      _
    // Predicated region
    $region14: #{tpu_custom_call.1} parent=1 // pred_check
      _
    $region15: #{tpu_custom_call.1} parent=1 // pred_check_branch
      %59 = sbr.rel (0) target = $region17
    $region16: #{tpu_custom_call.1} parent=1 // pred_region
      _
    $region17: #{tpu_custom_call.1} parent=1 // pred_fallthru
      _
    // Predicated region
    $region18: #{tpu_custom_call.1} parent=1 // pred_check
      _
    $region19: #{tpu_custom_call.1} parent=1 // pred_check_branch
      %61 = sbr.rel (0) target = $region21
    $region20: #{tpu_custom_call.1} parent=1 // pred_region
      %s63 = ssub.s32 2048, 2048
      %64 = vsyncadd [#allocation10], %s63
      %s65 = sshll.u32 [#allocation9], 4
      %s66 = int_to_ptr.vmem [resolvable:$true] %s65
      %71 = dma.hbm_to_vmem [thread:$0]  %s4, 2048, %s66, [#allocation10], 128, 128, 8
    $region21: #{tpu_custom_call.1} parent=1 // pred_fallthru
      _
    // Predicated region
    $region22: #{tpu_custom_call.1} parent=1 // pred_check
      _
    $region23: #{tpu_custom_call.1} parent=1 // pred_check_branch
      %73 = sbr.rel (0) target = $region25
    $region24: #{tpu_custom_call.1} parent=1 // pred_region
      _
    $region25: #{tpu_custom_call.1} parent=1 // pred_fallthru
      _
    // Predicated region
    $region26: #{tpu_custom_call.1} parent=1 // pred_check
      _
    $region27: #{tpu_custom_call.1} parent=1 // pred_check_branch
      %75 = sbr.rel (0) target = $region29
    $region28: #{tpu_custom_call.1} parent=1 // pred_region
      %s77 = ssub.s32 4096, 4096
      %78 = vsyncadd [#allocation10], %s77
      %s79 = sshll.u32 [#allocation11], 4
      %s80 = int_to_ptr.vmem [resolvable:$true] %s79
      %85 = dma.hbm_to_vmem [thread:$0]  %s6, 4096, %s80, [#allocation10], 256, 256, 16
    $region29: #{tpu_custom_call.1} parent=1 // pred_fallthru
      _
    // Predicated region
    $region30: #{tpu_custom_call.1} parent=1 // pred_check
      _
    $region31: #{tpu_custom_call.1} parent=1 // pred_check_branch
      %87 = sbr.rel (0) target = $region33
    $region32: #{tpu_custom_call.1} parent=1 // pred_region
      _
    $region33: #{tpu_custom_call.1} parent=1 // pred_fallthru
      _
    // Predicated region
    $region34: #{tpu_custom_call.1} parent=1 // pred_check
      _
    $region35: #{tpu_custom_call.1} parent=1 // pred_check_branch
      %89 = sbr.rel (0) target = $region37
    $region36: #{tpu_custom_call.1} parent=1 // pred_region
      %s91 = ssub.s32 4096, 4096
      %92 = vsyncadd [#allocation13], %s91
      %s93 = sshll.u32 [#allocation12], 4
      %s94 = int_to_ptr.vmem [resolvable:$true] %s93
      %99 = dma.hbm_to_vmem [thread:$0]  %s8, 4096, %s94, [#allocation13], 128, 128, 8
    $region37: #{tpu_custom_call.1} parent=1 // pred_fallthru
      _
    // Predicated region
    $region38: #{tpu_custom_call.1} parent=1 // pred_check
      _
    $region39: #{tpu_custom_call.1} parent=1 // pred_check_branch
      %101 = sbr.rel (0) target = $region41
    $region40: #{tpu_custom_call.1} parent=1 // pred_region
      _
    $region41: #{tpu_custom_call.1} parent=1 // pred_fallthru
      _
    // Predicated region
    $region42: #{tpu_custom_call.1} parent=1 // pred_check
      _
    $region43: #{tpu_custom_call.1} parent=1 // pred_check_branch
      %103 = sbr.rel (0) target = $region45
    $region44: #{tpu_custom_call.1} parent=1 // pred_region
      %104 = dma.done [#allocation4], 768
    $region45: #{tpu_custom_call.1} parent=1 // pred_fallthru
      _
    // Predicated region
    $region46: #{tpu_custom_call.1} parent=1 // pred_check
      _
    $region47: #{tpu_custom_call.1} parent=1 // pred_check_branch
      %106 = sbr.rel (0) target = $region49
    $region48: #{tpu_custom_call.1} parent=1 // pred_region
      %107 = dma.done [#allocation7], 128
    $region49: #{tpu_custom_call.1} parent=1 // pred_fallthru
      _
    // Predicated region
    $region50: #{tpu_custom_call.1} parent=1 // pred_check
      _
    $region51: #{tpu_custom_call.1} parent=1 // pred_check_branch
      %109 = sbr.rel (0) target = $region53
    $region52: #{tpu_custom_call.1} parent=1 // pred_region
      %110 = dma.done [#allocation7], 384
    $region53: #{tpu_custom_call.1} parent=1 // pred_fallthru
      _
    // Predicated region
    $region54: #{tpu_custom_call.1} parent=1 // pred_check
      _
    $region55: #{tpu_custom_call.1} parent=1 // pred_check_branch
      %112 = sbr.rel (0) target = $region57
    $region56: #{tpu_custom_call.1} parent=1 // pred_region
      %113 = dma.done [#allocation10], 2048
    $region57: #{tpu_custom_call.1} parent=1 // pred_fallthru
      _
    // Predicated region
    $region58: #{tpu_custom_call.1} parent=1 // pred_check
      _
    $region59: #{tpu_custom_call.1} parent=1 // pred_check_branch
      %115 = sbr.rel (0) target = $region61
    $region60: #{tpu_custom_call.1} parent=1 // pred_region
      %116 = dma.done [#allocation10], 4096
    $region61: #{tpu_custom_call.1} parent=1 // pred_fallthru
      _
    // Predicated region
    $region62: #{tpu_custom_call.1} parent=1 // pred_check
      _
    $region63: #{tpu_custom_call.1} parent=1 // pred_check_branch
      %118 = sbr.rel (0) target = $region65
    $region64: #{tpu_custom_call.1} parent=1 // pred_region
      %119 = dma.done [#allocation13], 4096
    $region65: #{tpu_custom_call.1} parent=1 // pred_fallthru
      _
    %p120 = scmp.eq.s32.totalorder 0, 0
    // Predicated region
    $region66: #{tpu_custom_call.1} parent=1 // pred_check
      %p121 = pneg %p120
    $region67: #{tpu_custom_call.1} parent=1 // pred_check_branch
      %123 = sbr.rel (%p121) target = $region69
    $region68: #{tpu_custom_call.1} parent=1 // pred_region
      %124 = vst [vmem:[#allocation2] sm:$0xff] 0.0
      %125 = vst [vmem:[#allocation2 + $0x8] sm:$0xff] 0.0
      %126 = vst [vmem:[#allocation2 + $0x10] sm:$0xff] 0.0
      %127 = vst [vmem:[#allocation2 + $0x18] sm:$0xff] 0.0
      %128 = vst [vmem:[#allocation2 + $0x20] sm:$0xff] 0.0
      %129 = vst [vmem:[#allocation2 + $0x28] sm:$0xff] 0.0
    $region69: #{tpu_custom_call.1} parent=1 // pred_fallthru
      _
    %v130 = vld [vmem:[#allocation2] sm:$0xff]
    %v131 = vld [vmem:[#allocation2 + $0x8] sm:$0xff]
    %v132 = vld [vmem:[#allocation2 + $0x10] sm:$0xff]
    %v133 = vld [vmem:[#allocation2 + $0x18] sm:$0xff]
    %v134 = vld [vmem:[#allocation2 + $0x20] sm:$0xff]
    %v135 = vld [vmem:[#allocation2 + $0x28] sm:$0xff]
    %v136 = vld [vmem:[#allocation3] sm:$0xff]
    %v137 = vld [vmem:[#allocation3 + $0x8] sm:$0xff]
    %v138 = vld [vmem:[#allocation3 + $0x10] sm:$0xff]
    %v139 = vld [vmem:[#allocation3 + $0x18] sm:$0xff]
    %v140 = vld [vmem:[#allocation3 + $0x20] sm:$0xff]
    %v141 = vld [vmem:[#allocation3 + $0x28] sm:$0xff]
    %v142 = vadd.f32 %v130, %v136
    %v143 = vadd.f32 %v131, %v137
    %v144 = vadd.f32 %v132, %v138
    %v145 = vadd.f32 %v133, %v139
    %v146 = vadd.f32 %v134, %v140
    %v147 = vadd.f32 %v135, %v141
    %148 = vst [vmem:[#allocation2] sm:$0xff] %v142
    %149 = vst [vmem:[#allocation2 + $0x8] sm:$0xff] %v143
    %150 = vst [vmem:[#allocation2 + $0x10] sm:$0xff] %v144
    %151 = vst [vmem:[#allocation2 + $0x18] sm:$0xff] %v145
    %152 = vst [vmem:[#allocation2 + $0x20] sm:$0xff] %v146
    %153 = vst [vmem:[#allocation2 + $0x28] sm:$0xff] %v147
    // Predicated region
    $region70: #{tpu_custom_call.1} parent=1 // pred_check
      %p154 = pneg %p120
    $region71: #{tpu_custom_call.1} parent=1 // pred_check_branch
      %156 = sbr.rel (%p154) target = $region73
    $region72: #{tpu_custom_call.1} parent=1 // pred_region
      %v157 = vld [vmem:[#allocation2] sm:$0xff]
      %v158 = vld [vmem:[#allocation2 + $0x8] sm:$0xff]
      %v159 = vld [vmem:[#allocation2 + $0x10] sm:$0xff]
      %v160 = vld [vmem:[#allocation2 + $0x18] sm:$0xff]
      %v161 = vld [vmem:[#allocation2 + $0x20] sm:$0xff]
      %v162 = vld [vmem:[#allocation2 + $0x28] sm:$0xff]
      %v163 = vadd.f32 %v157, %v158
      %164 = vadd.xlane.f32.xlu0 %v163
      %v165 = vpop.xlane.xlu0 %164
      %v166 = vadd.f32 %v159, %v160
      %167 = vadd.xlane.f32.xlu0 %v166
      %v168 = vpop.xlane.xlu0 %167
      %v169 = vadd.f32 %v161, %v162
      %170 = vadd.xlane.f32.xlu0 %v169
      %v171 = vpop.xlane.xlu0 %170
      %v172 = vmul.f32 %v165, 0.00390625
      %v173 = vmul.f32 %v168, 0.00390625
      %v174 = vmul.f32 %v171, 0.00390625
      %v175 = vlaneseq
      %v176 = vshrl.u32 %v175, 7
      %v177 = vadd.s32 %v176, 8
      %v178 = vadd.s32 %v176, 16
      %s179 = smul.u32 0, 24
      %s180 = ssub.s32 12, %s179
      %v181 = vstv %s180
      %vm182 = vcmp.lt.s32.totalorder %v176, %v181
      %vm183 = vcmp.lt.s32.totalorder %v177, %v181
      %vm184 = vcmp.lt.s32.totalorder %v178, %v181
      %v185 = vsel %vm182, %v172, 0.0
      %v186 = vsel %vm183, %v173, 0.0
      %v187 = vsel %vm184, %v174, 0.0
      %v188 = vld [vmem:[#allocation8] sm:$0xff]
      %v189 = vld [vmem:[#allocation8 + $0x8] sm:$0xff]
      %v190 = vld [vmem:[#allocation8 + $0x10] sm:$0xff]
      %v191 = vmul.f32 %v185, %v188
      %v192 = vmul.f32 %v186, %v189
      %v193 = vmul.f32 %v187, %v190
      %v194 = vld [vmem:[#allocation6] sm:$0xff]
      %v195 = vld [vmem:[%s3] sm:$0x1]
      %v197 = vlaneseq
      %v198 = vshrl.u32 %v197, 7
      %v199 = vsub.s32 0, %v198
      %v200 = vrot.slane %v195, %v199
      %vm202 = vcmask 195584
      %v204 = vsel %vm202, %v194, 0
      %206 = vmatprep.subr.mxu0 0.0
      %207 = vmatpush1.msra.mxu0 %v191
      %208 = vmatprep.subr.mxu0 0.0
      %209 = vmatpush1.msra.mxu0 %v192
      %210 = vmatprep.subr.mxu0 0.0
      %211 = vmatpush1.msra.mxu0 %v193
      %212 = vmatprep.subr.mxu0 0.0
      %213 = vmatpush1.msra.mxu0 0.0
      %214 = vmatprep.subr.mxu0 0.0
      %215 = vmatpush1.msra.mxu0 0.0
      %216 = vmatprep.subr.mxu0 0.0
      %217 = vmatpush1.msra.mxu0 0.0
      %218 = vmatprep.subr.mxu0 0.0
      %219 = vmatpush1.msra.mxu0 0.0
      %220 = vmatprep.subr.mxu0 0.0
      %221 = vmatpush1.msra.mxu0 0.0
      %222 = vmatprep.subr.mxu0 0.0
      %223 = vmatpush1.msra.mxu0 0.0
      %224 = vmatprep.subr.mxu0 0.0
      %225 = vmatpush1.msra.mxu0 0.0
      %226 = vmatprep.subr.mxu0 0.0
      %227 = vmatpush1.msra.mxu0 0.0
      %228 = vmatprep.subr.mxu0 0.0
      %229 = vmatpush1.msra.mxu0 0.0
      %230 = vmatprep.subr.mxu0 0.0
      %231 = vmatpush1.msra.mxu0 0.0
      %232 = vmatprep.subr.mxu0 0.0
      %233 = vmatpush1.msra.mxu0 0.0
      %234 = vmatprep.subr.mxu0 0.0
      %235 = vmatpush1.msra.mxu0 0.0
      %236 = vmatprep.subr.mxu0 0.0
      %237 = vmatpush1.msra.mxu0 0.0
      %238 = vmatprep.subr.mxu0 0.0
      %239 = vmatpush1.msra.mxu0 0.0
      %240 = vmatprep.subr.mxu0 0.0
      %241 = vmatpush1.msra.mxu0 0.0
      %242 = vmatprep.subr.mxu0 0.0
      %243 = vmatpush1.msra.mxu0 0.0
      %244 = vmatprep.subr.mxu0 0.0
      %245 = vmatpush1.msra.mxu0 0.0
      %246 = vmatprep.subr.mxu0 0.0
      %247 = vmatpush1.msra.mxu0 0.0
      %248 = vmatprep.subr.mxu0 0.0
      %249 = vmatpush1.msra.mxu0 0.0
      %250 = vmatprep.subr.mxu0 0.0
      %251 = vmatpush1.msra.mxu0 0.0
      %252 = vmatprep.subr.mxu0 0.0
      %253 = vmatpush1.msra.mxu0 0.0
      %254 = vmatprep.subr.mxu0 0.0
      %255 = vmatpush1.msra.mxu0 0.0
      %256 = vmatprep.subr.mxu0 0.0
      %257 = vmatpush1.msra.mxu0 0.0
      %258 = vmatprep.subr.mxu0 0.0
      %259 = vmatpush1.msra.mxu0 0.0
      %260 = vmatprep.subr.mxu0 0.0
      %261 = vmatpush1.msra.mxu0 0.0
      %262 = vmatprep.subr.mxu0 0.0
      %263 = vmatpush1.msra.mxu0 0.0
      %264 = vmatprep.subr.mxu0 0.0
      %265 = vmatpush1.msra.mxu0 0.0
      %266 = vmatprep.subr.mxu0 0.0
      %267 = vmatpush1.msra.mxu0 0.0
      %268 = vmatprep.subr.mxu0 0.0
      %269 = vmatpush1.msra.mxu0 0.0
      %270 = vmatprep.mubr.f32.mxu0 0.0
      %271 = vmatmul.mubr.f32.gmra.mrb[0].mxu0 %v204
      %v272 = vpop.f32.mrb[0].mxu0
      %v273 = vadd.f32 %v200, %v272
      %v274 = vpop.f32.mrb[0].mxu0
      %275 = vdwg.mxu0
      %276 = vst [vmem:[#allocation15] sm:$0xff] %v273
      %v277 = vld [vmem:[#allocation9] sm:$0xff]
      %v278 = vld [vmem:[#allocation9 + $0x8] sm:$0xff]
      %v279 = vld [vmem:[#allocation9 + $0x10] sm:$0xff]
      %v280 = vld [vmem:[#allocation9 + $0x18] sm:$0xff]
      %v281 = vld [vmem:[#allocation9 + $0x20] sm:$0xff]
      %v282 = vld [vmem:[#allocation9 + $0x28] sm:$0xff]
      %v283 = vld [vmem:[#allocation9 + $0x30] sm:$0xff]
      %v284 = vld [vmem:[#allocation9 + $0x38] sm:$0xff]
      %v285 = vld [vmem:[#allocation9 + $0x40] sm:$0xff]
      %v286 = vld [vmem:[#allocation9 + $0x48] sm:$0xff]
      %v287 = vld [vmem:[#allocation9 + $0x50] sm:$0xff]
      %v288 = vld [vmem:[#allocation9 + $0x58] sm:$0xff]
      %v289 = vld [vmem:[#allocation9 + $0x60] sm:$0xff]
      %v290 = vld [vmem:[#allocation9 + $0x68] sm:$0xff]
      %v291 = vld [vmem:[#allocation9 + $0x70] sm:$0xff]
      %v292 = vld [vmem:[#allocation9 + $0x78] sm:$0xff]
      %v293 = vld [vmem:[%s5] sm:$0x1]
      %v295 = vlaneseq
      %v296 = vshrl.u32 %v295, 7
      %v297 = vsub.s32 0, %v296
      %v298 = vrot.slane %v293, %v297
      %300 = vmatprep.subr.mxu0 0.0
      %301 = vmatpush1.msra.mxu0 %v277
      %302 = vmatprep.subr.mxu0 0.0
      %303 = vmatpush1.msra.mxu0 %v278
      %304 = vmatprep.subr.mxu0 0.0
      %305 = vmatpush1.msra.mxu0 %v279
      %306 = vmatprep.subr.mxu0 0.0
      %307 = vmatpush1.msra.mxu0 %v280
      %308 = vmatprep.subr.mxu0 0.0
      %309 = vmatpush1.msra.mxu0 %v281
      %310 = vmatprep.subr.mxu0 0.0
      %311 = vmatpush1.msra.mxu0 %v282
      %312 = vmatprep.subr.mxu0 0.0
      %313 = vmatpush1.msra.mxu0 %v283
      %314 = vmatprep.subr.mxu0 0.0
      %315 = vmatpush1.msra.mxu0 %v284
      %316 = vmatprep.subr.mxu0 0.0
      %317 = vmatpush1.msra.mxu0 %v285
      %318 = vmatprep.subr.mxu0 0.0
      %319 = vmatpush1.msra.mxu0 %v286
      %320 = vmatprep.subr.mxu0 0.0
      %321 = vmatpush1.msra.mxu0 %v287
      %322 = vmatprep.subr.mxu0 0.0
      %323 = vmatpush1.msra.mxu0 %v288
      %324 = vmatprep.subr.mxu0 0.0
      %325 = vmatpush1.msra.mxu0 %v289
      %326 = vmatprep.subr.mxu0 0.0
      %327 = vmatpush1.msra.mxu0 %v290
      %328 = vmatprep.subr.mxu0 0.0
      %329 = vmatpush1.msra.mxu0 %v291
      %330 = vmatprep.subr.mxu0 0.0
      %331 = vmatpush1.msra.mxu0 %v292
      %332 = vmatprep.subr.mxu0 0.0
      %333 = vmatpush1.msra.mxu0 0.0
      %334 = vmatprep.subr.mxu0 0.0
      %335 = vmatpush1.msra.mxu0 0.0
      %336 = vmatprep.subr.mxu0 0.0
      %337 = vmatpush1.msra.mxu0 0.0
      %338 = vmatprep.subr.mxu0 0.0
      %339 = vmatpush1.msra.mxu0 0.0
      %340 = vmatprep.subr.mxu0 0.0
      %341 = vmatpush1.msra.mxu0 0.0
      %342 = vmatprep.subr.mxu0 0.0
      %343 = vmatpush1.msra.mxu0 0.0
      %344 = vmatprep.subr.mxu0 0.0
      %345 = vmatpush1.msra.mxu0 0.0
      %346 = vmatprep.subr.mxu0 0.0
      %347 = vmatpush1.msra.mxu0 0.0
      %348 = vmatprep.subr.mxu0 0.0
      %349 = vmatpush1.msra.mxu0 0.0
      %350 = vmatprep.subr.mxu0 0.0
      %351 = vmatpush1.msra.mxu0 0.0
      %352 = vmatprep.subr.mxu0 0.0
      %353 = vmatpush1.msra.mxu0 0.0
      %354 = vmatprep.subr.mxu0 0.0
      %355 = vmatpush1.msra.mxu0 0.0
      %356 = vmatprep.subr.mxu0 0.0
      %357 = vmatpush1.msra.mxu0 0.0
      %358 = vmatprep.subr.mxu0 0.0
      %359 = vmatpush1.msra.mxu0 0.0
      %360 = vmatprep.subr.mxu0 0.0
      %361 = vmatpush1.msra.mxu0 0.0
      %362 = vmatprep.subr.mxu0 0.0
      %363 = vmatpush1.msra.mxu0 0.0
      %364 = vmatprep.mubr.f32.mxu0 0.0
      %365 = vmatmul.mubr.f32.gmra.mrb[0].mxu0 %v273
      %v366 = vpop.f32.mrb[0].mxu0
      %v367 = vadd.f32 %v298, %v366
      %v368 = vpop.f32.mrb[0].mxu0
      %369 = vdwg.mxu0
      %370 = vst [vmem:[#allocation14] sm:$0xff] %v367
      %v371 = vmax.f32 %v273, 0.0
      %v372 = vld [vmem:[#allocation11] sm:$0xff]
      %v373 = vld [vmem:[#allocation11 + $0x8] sm:$0xff]
      %v374 = vld [vmem:[#allocation11 + $0x10] sm:$0xff]
      %v375 = vld [vmem:[#allocation11 + $0x18] sm:$0xff]
      %v376 = vld [vmem:[#allocation11 + $0x20] sm:$0xff]
      %v377 = vld [vmem:[#allocation11 + $0x28] sm:$0xff]
      %v378 = vld [vmem:[#allocation11 + $0x30] sm:$0xff]
      %v379 = vld [vmem:[#allocation11 + $0x38] sm:$0xff]
      %v380 = vld [vmem:[#allocation11 + $0x40] sm:$0xff]
      %v381 = vld [vmem:[#allocation11 + $0x48] sm:$0xff]
      %v382 = vld [vmem:[#allocation11 + $0x50] sm:$0xff]
      %v383 = vld [vmem:[#allocation11 + $0x58] sm:$0xff]
      %v384 = vld [vmem:[#allocation11 + $0x60] sm:$0xff]
      %v385 = vld [vmem:[#allocation11 + $0x68] sm:$0xff]
      %v386 = vld [vmem:[#allocation11 + $0x70] sm:$0xff]
      %v387 = vld [vmem:[#allocation11 + $0x78] sm:$0xff]
      %v388 = vld [vmem:[#allocation11 + $0x80] sm:$0xff]
      %v389 = vld [vmem:[#allocation11 + $0x88] sm:$0xff]
      %v390 = vld [vmem:[#allocation11 + $0x90] sm:$0xff]
      %v391 = vld [vmem:[#allocation11 + $0x98] sm:$0xff]
      %v392 = vld [vmem:[#allocation11 + $0xa0] sm:$0xff]
      %v393 = vld [vmem:[#allocation11 + $0xa8] sm:$0xff]
      %v394 = vld [vmem:[#allocation11 + $0xb0] sm:$0xff]
      %v395 = vld [vmem:[#allocation11 + $0xb8] sm:$0xff]
      %v396 = vld [vmem:[#allocation11 + $0xc0] sm:$0xff]
      %v397 = vld [vmem:[#allocation11 + $0xc8] sm:$0xff]
      %v398 = vld [vmem:[#allocation11 + $0xd0] sm:$0xff]
      %v399 = vld [vmem:[#allocation11 + $0xd8] sm:$0xff]
      %v400 = vld [vmem:[#allocation11 + $0xe0] sm:$0xff]
      %v401 = vld [vmem:[#allocation11 + $0xe8] sm:$0xff]
      %v402 = vld [vmem:[#allocation11 + $0xf0] sm:$0xff]
      %v403 = vld [vmem:[#allocation11 + $0xf8] sm:$0xff]
      %v404 = vld [vmem:[%s7] sm:$0x3]
      %v406 = vlaneseq
      %v407 = vshrl.u32 %v406, 7
      %v408 = vsub.s32 0, %v407
      %v409 = vrot.slane %v404, %v408
      %v410 = vlaneseq
      %v411 = vshrl.u32 %v410, 7
      %v412 = vsub.s32 1, %v411
      %v413 = vrot.slane %v404, %v412
      %416 = vmatprep.subr.mxu0 %v373
      %417 = vmatpush1.msra.mxu0 %v372
      %418 = vmatprep.subr.mxu0 %v375
      %419 = vmatpush1.msra.mxu0 %v374
      %420 = vmatprep.subr.mxu0 %v377
      %421 = vmatpush1.msra.mxu0 %v376
      %422 = vmatprep.subr.mxu0 %v379
      %423 = vmatpush1.msra.mxu0 %v378
      %424 = vmatprep.subr.mxu0 %v381
      %425 = vmatpush1.msra.mxu0 %v380
      %426 = vmatprep.subr.mxu0 %v383
      %427 = vmatpush1.msra.mxu0 %v382
      %428 = vmatprep.subr.mxu0 %v385
      %429 = vmatpush1.msra.mxu0 %v384
      %430 = vmatprep.subr.mxu0 %v387
      %431 = vmatpush1.msra.mxu0 %v386
      %432 = vmatprep.subr.mxu0 %v389
      %433 = vmatpush1.msra.mxu0 %v388
      %434 = vmatprep.subr.mxu0 %v391
      %435 = vmatpush1.msra.mxu0 %v390
      %436 = vmatprep.subr.mxu0 %v393
      %437 = vmatpush1.msra.mxu0 %v392
      %438 = vmatprep.subr.mxu0 %v395
      %439 = vmatpush1.msra.mxu0 %v394
      %440 = vmatprep.subr.mxu0 %v397
      %441 = vmatpush1.msra.mxu0 %v396
      %442 = vmatprep.subr.mxu0 %v399
      %443 = vmatpush1.msra.mxu0 %v398
      %444 = vmatprep.subr.mxu0 %v401
      %445 = vmatpush1.msra.mxu0 %v400
      %446 = vmatprep.subr.mxu0 %v403
      %447 = vmatpush1.msra.mxu0 %v402
      %448 = vmatprep.subr.mxu0 0.0
      %449 = vmatpush1.msra.mxu0 0.0
      %450 = vmatprep.subr.mxu0 0.0
      %451 = vmatpush1.msra.mxu0 0.0
      %452 = vmatprep.subr.mxu0 0.0
      %453 = vmatpush1.msra.mxu0 0.0
      %454 = vmatprep.subr.mxu0 0.0
      %455 = vmatpush1.msra.mxu0 0.0
      %456 = vmatprep.subr.mxu0 0.0
      %457 = vmatpush1.msra.mxu0 0.0
      %458 = vmatprep.subr.mxu0 0.0
      %459 = vmatpush1.msra.mxu0 0.0
      %460 = vmatprep.subr.mxu0 0.0
      %461 = vmatpush1.msra.mxu0 0.0
      %462 = vmatprep.subr.mxu0 0.0
      %463 = vmatpush1.msra.mxu0 0.0
      %464 = vmatprep.subr.mxu0 0.0
      %465 = vmatpush1.msra.mxu0 0.0
      %466 = vmatprep.subr.mxu0 0.0
      %467 = vmatpush1.msra.mxu0 0.0
      %468 = vmatprep.subr.mxu0 0.0
      %469 = vmatpush1.msra.mxu0 0.0
      %470 = vmatprep.subr.mxu0 0.0
      %471 = vmatpush1.msra.mxu0 0.0
      %472 = vmatprep.subr.mxu0 0.0
      %473 = vmatpush1.msra.mxu0 0.0
      %474 = vmatprep.subr.mxu0 0.0
      %475 = vmatpush1.msra.mxu0 0.0
      %476 = vmatprep.subr.mxu0 0.0
      %477 = vmatpush1.msra.mxu0 0.0
      %478 = vmatprep.subr.mxu0 0.0
      %479 = vmatpush1.msra.mxu0 0.0
      %480 = vmatprep.mubr.f32.mxu0 0.0
      %481 = vmatmul.mubr.f32.gmra.mrb[0].mxu0 %v371
      %v482 = vpop.f32.mrb[0].mxu0
      %v483 = vadd.f32 %v409, %v482
      %v484 = vpop.f32.mrb[0].mxu0
      %v485 = vadd.f32 %v413, %v484
      %486 = vdwg.mxu0
      %v487 = vmax.f32 %v483, 0.0
      %v488 = vmax.f32 %v485, 0.0
      %v489 = vld [vmem:[#allocation12] sm:$0xff]
      %v490 = vld [vmem:[#allocation12 + $0x8] sm:$0xff]
      %v491 = vld [vmem:[#allocation12 + $0x10] sm:$0xff]
      %v492 = vld [vmem:[#allocation12 + $0x18] sm:$0xff]
      %v493 = vld [vmem:[#allocation12 + $0x20] sm:$0xff]
      %v494 = vld [vmem:[#allocation12 + $0x28] sm:$0xff]
      %v495 = vld [vmem:[#allocation12 + $0x30] sm:$0xff]
      %v496 = vld [vmem:[#allocation12 + $0x38] sm:$0xff]
      %v497 = vld [vmem:[#allocation12 + $0x40] sm:$0xff]
      %v498 = vld [vmem:[#allocation12 + $0x48] sm:$0xff]
      %v499 = vld [vmem:[#allocation12 + $0x50] sm:$0xff]
      %v500 = vld [vmem:[#allocation12 + $0x58] sm:$0xff]
      %v501 = vld [vmem:[#allocation12 + $0x60] sm:$0xff]
      %v502 = vld [vmem:[#allocation12 + $0x68] sm:$0xff]
      %v503 = vld [vmem:[#allocation12 + $0x70] sm:$0xff]
      %v504 = vld [vmem:[#allocation12 + $0x78] sm:$0xff]
      %v505 = vld [vmem:[%s9] sm:$0x1]
      %v507 = vlaneseq
      %v508 = vshrl.u32 %v507, 7
      %v509 = vsub.s32 0, %v508
      %v510 = vrot.slane %v505, %v509
      %512 = vmatprep.subr.mxu0 0.0
      %513 = vmatpush1.msra.mxu0 %v489
      %514 = vmatprep.subr.mxu0 0.0
      %515 = vmatpush1.msra.mxu0 %v490
      %516 = vmatprep.subr.mxu0 0.0
      %517 = vmatpush1.msra.mxu0 %v491
      %518 = vmatprep.subr.mxu0 0.0
      %519 = vmatpush1.msra.mxu0 %v492
      %520 = vmatprep.subr.mxu0 0.0
      %521 = vmatpush1.msra.mxu0 %v493
      %522 = vmatprep.subr.mxu0 0.0
      %523 = vmatpush1.msra.mxu0 %v494
      %524 = vmatprep.subr.mxu0 0.0
      %525 = vmatpush1.msra.mxu0 %v495
      %526 = vmatprep.subr.mxu0 0.0
      %527 = vmatpush1.msra.mxu0 %v496
      %528 = vmatprep.subr.mxu0 0.0
      %529 = vmatpush1.msra.mxu0 %v497
      %530 = vmatprep.subr.mxu0 0.0
      %531 = vmatpush1.msra.mxu0 %v498
      %532 = vmatprep.subr.mxu0 0.0
      %533 = vmatpush1.msra.mxu0 %v499
      %534 = vmatprep.subr.mxu0 0.0
      %535 = vmatpush1.msra.mxu0 %v500
      %536 = vmatprep.subr.mxu0 0.0
      %537 = vmatpush1.msra.mxu0 %v501
      %538 = vmatprep.subr.mxu0 0.0
      %539 = vmatpush1.msra.mxu0 %v502
      %540 = vmatprep.subr.mxu0 0.0
      %541 = vmatpush1.msra.mxu0 %v503
      %542 = vmatprep.subr.mxu0 0.0
      %543 = vmatpush1.msra.mxu0 %v504
      %544 = vmatprep.subr.mxu0 0.0
      %545 = vmatpush1.msra.mxu0 0.0
      %546 = vmatprep.subr.mxu0 0.0
      %547 = vmatpush1.msra.mxu0 0.0
      %548 = vmatprep.subr.mxu0 0.0
      %549 = vmatpush1.msra.mxu0 0.0
      %550 = vmatprep.subr.mxu0 0.0
      %551 = vmatpush1.msra.mxu0 0.0
      %552 = vmatprep.subr.mxu0 0.0
      %553 = vmatpush1.msra.mxu0 0.0
      %554 = vmatprep.subr.mxu0 0.0
      %555 = vmatpush1.msra.mxu0 0.0
      %556 = vmatprep.subr.mxu0 0.0
      %557 = vmatpush1.msra.mxu0 0.0
      %558 = vmatprep.subr.mxu0 0.0
      %559 = vmatpush1.msra.mxu0 0.0
      %560 = vmatprep.subr.mxu0 0.0
      %561 = vmatpush1.msra.mxu0 0.0
      %562 = vmatprep.subr.mxu0 0.0
      %563 = vmatpush1.msra.mxu0 0.0
      %564 = vmatprep.subr.mxu0 0.0
      %565 = vmatpush1.msra.mxu0 0.0
      %566 = vmatprep.subr.mxu0 0.0
      %567 = vmatpush1.msra.mxu0 0.0
      %568 = vmatprep.subr.mxu0 0.0
      %569 = vmatpush1.msra.mxu0 0.0
      %570 = vmatprep.subr.mxu0 0.0
      %571 = vmatpush1.msra.mxu0 0.0
      %572 = vmatprep.subr.mxu0 0.0
      %573 = vmatpush1.msra.mxu0 0.0
      %574 = vmatprep.subr.mxu0 0.0
      %575 = vmatpush1.msra.mxu0 0.0
      %576 = vmatprep.mubr.f32.mxu0 0.0
      %577 = vmatmul.mubr.f32.gmra.mrb[0].mxu0 %v487
      %v578 = vpop.f32.mrb[0].mxu0
      %v579 = vadd.f32 %v510, %v578
      %v580 = vpop.f32.mrb[0].mxu0
      %581 = vdwg.mxu0
      %582 = vmax.xlane.f32.xlu0 %v579
      %v583 = vpop.xlane.xlu0 %582
      %v584 = vsub.f32 %v579, %v583
      %v585 = vmul.f32 %v584, 1.442695
      %v586 = vpow.pop %v585
      %587 = vadd.xlane.f32.xlu0 %v586
      %v588 = vpop.xlane.xlu0 %587
      %v589 = vlog2.pop %v588
      %v590 = vmul.f32 %v589, 0.6931472
      %v591 = vadd.f32 %v590, %v583
      %v592 = vsub.f32 %v579, %v591
      %593 = vst [vmem:[#allocation17] sm:$0xff] %v592
      %s594 = scalar_lea.vmem [#allocation12], 128
      %v595 = vld [vmem:[%s594] sm:$0xff]
      %v596 = vld [vmem:[%s594 + $0x8] sm:$0xff]
      %v597 = vld [vmem:[%s594 + $0x10] sm:$0xff]
      %v598 = vld [vmem:[%s594 + $0x18] sm:$0xff]
      %v599 = vld [vmem:[%s594 + $0x20] sm:$0xff]
      %v600 = vld [vmem:[%s594 + $0x28] sm:$0xff]
      %v601 = vld [vmem:[%s594 + $0x30] sm:$0xff]
      %v602 = vld [vmem:[%s594 + $0x38] sm:$0xff]
      %v603 = vld [vmem:[%s594 + $0x40] sm:$0xff]
      %v604 = vld [vmem:[%s594 + $0x48] sm:$0xff]
      %v605 = vld [vmem:[%s594 + $0x50] sm:$0xff]
      %v606 = vld [vmem:[%s594 + $0x58] sm:$0xff]
      %v607 = vld [vmem:[%s594 + $0x60] sm:$0xff]
      %v608 = vld [vmem:[%s594 + $0x68] sm:$0xff]
      %v609 = vld [vmem:[%s594 + $0x70] sm:$0xff]
      %v610 = vld [vmem:[%s594 + $0x78] sm:$0xff]
      %s611 = scalar_lea.vmem %s9, 1
      %v612 = vld [vmem:[%s611] sm:$0x1]
      %v614 = vlaneseq
      %v615 = vshrl.u32 %v614, 7
      %v616 = vsub.s32 0, %v615
      %v617 = vrot.slane %v612, %v616
      %619 = vmatprep.subr.mxu0 0.0
      %620 = vmatpush1.msra.mxu0 %v595
      %621 = vmatprep.subr.mxu0 0.0
      %622 = vmatpush1.msra.mxu0 %v596
      %623 = vmatprep.subr.mxu0 0.0
      %624 = vmatpush1.msra.mxu0 %v597
      %625 = vmatprep.subr.mxu0 0.0
      %626 = vmatpush1.msra.mxu0 %v598
      %627 = vmatprep.subr.mxu0 0.0
      %628 = vmatpush1.msra.mxu0 %v599
      %629 = vmatprep.subr.mxu0 0.0
      %630 = vmatpush1.msra.mxu0 %v600
      %631 = vmatprep.subr.mxu0 0.0
      %632 = vmatpush1.msra.mxu0 %v601
      %633 = vmatprep.subr.mxu0 0.0
      %634 = vmatpush1.msra.mxu0 %v602
      %635 = vmatprep.subr.mxu0 0.0
      %636 = vmatpush1.msra.mxu0 %v603
      %637 = vmatprep.subr.mxu0 0.0
      %638 = vmatpush1.msra.mxu0 %v604
      %639 = vmatprep.subr.mxu0 0.0
      %640 = vmatpush1.msra.mxu0 %v605
      %641 = vmatprep.subr.mxu0 0.0
      %642 = vmatpush1.msra.mxu0 %v606
      %643 = vmatprep.subr.mxu0 0.0
      %644 = vmatpush1.msra.mxu0 %v607
      %645 = vmatprep.subr.mxu0 0.0
      %646 = vmatpush1.msra.mxu0 %v608
      %647 = vmatprep.subr.mxu0 0.0
      %648 = vmatpush1.msra.mxu0 %v609
      %649 = vmatprep.subr.mxu0 0.0
      %650 = vmatpush1.msra.mxu0 %v610
      %651 = vmatprep.subr.mxu0 0.0
      %652 = vmatpush1.msra.mxu0 0.0
      %653 = vmatprep.subr.mxu0 0.0
      %654 = vmatpush1.msra.mxu0 0.0
      %655 = vmatprep.subr.mxu0 0.0
      %656 = vmatpush1.msra.mxu0 0.0
      %657 = vmatprep.subr.mxu0 0.0
      %658 = vmatpush1.msra.mxu0 0.0
      %659 = vmatprep.subr.mxu0 0.0
      %660 = vmatpush1.msra.mxu0 0.0
      %661 = vmatprep.subr.mxu0 0.0
      %662 = vmatpush1.msra.mxu0 0.0
      %663 = vmatprep.subr.mxu0 0.0
      %664 = vmatpush1.msra.mxu0 0.0
      %665 = vmatprep.subr.mxu0 0.0
      %666 = vmatpush1.msra.mxu0 0.0
      %667 = vmatprep.subr.mxu0 0.0
      %668 = vmatpush1.msra.mxu0 0.0
      %669 = vmatprep.subr.mxu0 0.0
      %670 = vmatpush1.msra.mxu0 0.0
      %671 = vmatprep.subr.mxu0 0.0
      %672 = vmatpush1.msra.mxu0 0.0
      %673 = vmatprep.subr.mxu0 0.0
      %674 = vmatpush1.msra.mxu0 0.0
      %675 = vmatprep.subr.mxu0 0.0
      %676 = vmatpush1.msra.mxu0 0.0
      %677 = vmatprep.subr.mxu0 0.0
      %678 = vmatpush1.msra.mxu0 0.0
      %679 = vmatprep.subr.mxu0 0.0
      %680 = vmatpush1.msra.mxu0 0.0
      %681 = vmatprep.subr.mxu0 0.0
      %682 = vmatpush1.msra.mxu0 0.0
      %683 = vmatprep.mubr.f32.mxu0 0.0
      %684 = vmatmul.mubr.f32.gmra.mrb[0].mxu0 %v488
      %v685 = vpop.f32.mrb[0].mxu0
      %v686 = vadd.f32 %v617, %v685
      %v687 = vpop.f32.mrb[0].mxu0
      %688 = vdwg.mxu0
      %689 = vmax.xlane.f32.xlu0 %v686
      %v690 = vpop.xlane.xlu0 %689
      %v691 = vsub.f32 %v686, %v690
      %v692 = vmul.f32 %v691, 1.442695
      %v693 = vpow.pop %v692
      %694 = vadd.xlane.f32.xlu0 %v693
      %v695 = vpop.xlane.xlu0 %694
      %v696 = vlog2.pop %v695
      %v697 = vmul.f32 %v696, 0.6931472
      %v698 = vadd.f32 %v697, %v690
      %v699 = vsub.f32 %v686, %v698
      %s700 = scalar_lea.vmem [#allocation17], 8
      %701 = vst [vmem:[%s700] sm:$0xff] %v699
    $region73: #{tpu_custom_call.1} parent=1 // pred_fallthru
      _
    // Predicated region
    $region74: #{tpu_custom_call.1} parent=1 // pred_check
      _
    $region75: #{tpu_custom_call.1} parent=1 // pred_check_branch
      %703 = sbr.rel (0) target = $region77
    $region76: #{tpu_custom_call.1} parent=1 // pred_region
      %s705 = ssub.s32 128, 128
      %706 = vsyncadd [#allocation5], %s705
      %s708 = sshll.u32 [#allocation14], 4
      %s709 = int_to_ptr.vmem [resolvable:$true] %s708
      %711 = dma.vmem_to_hbm [thread:$0]  %s709, 128, %s10, [#allocation5]
    $region77: #{tpu_custom_call.1} parent=1 // pred_fallthru
      _
    // Predicated region
    $region78: #{tpu_custom_call.1} parent=1 // pred_check
      _
    $region79: #{tpu_custom_call.1} parent=1 // pred_check_branch
      %713 = sbr.rel (0) target = $region81
    $region80: #{tpu_custom_call.1} parent=1 // pred_region
      %s715 = ssub.s32 128, 128
      %716 = vsyncadd [#allocation16], %s715
      %s718 = sshll.u32 [#allocation15], 4
      %s719 = int_to_ptr.vmem [resolvable:$true] %s718
      %721 = dma.vmem_to_hbm [thread:$0]  %s719, 128, %s11, [#allocation16]
    $region81: #{tpu_custom_call.1} parent=1 // pred_fallthru
      _
    // Predicated region
    $region82: #{tpu_custom_call.1} parent=1 // pred_check
      _
    $region83: #{tpu_custom_call.1} parent=1 // pred_check_branch
      %723 = sbr.rel (0) target = $region85
    $region84: #{tpu_custom_call.1} parent=1 // pred_region
      %s725 = ssub.s32 256, 256
      %726 = vsyncadd [#allocation16], %s725
      %s727 = sshll.u32 [#allocation17], 4
      %s728 = int_to_ptr.vmem [resolvable:$true] %s727
      %733 = dma.vmem_to_hbm [thread:$0]  %s728, 256, %s12, [#allocation16], 128, 128, 8
    $region85: #{tpu_custom_call.1} parent=1 // pred_fallthru
      _
    // Predicated region
    $region86: #{tpu_custom_call.1} parent=1 // pred_check
      _
    $region87: #{tpu_custom_call.1} parent=1 // pred_check_branch
      %735 = sbr.rel (0) target = $region89
    $region88: #{tpu_custom_call.1} parent=1 // pred_region
      %736 = dma.done [#allocation5], 128
    $region89: #{tpu_custom_call.1} parent=1 // pred_fallthru
      _
    // Predicated region
    $region90: #{tpu_custom_call.1} parent=1 // pred_check
      _
    $region91: #{tpu_custom_call.1} parent=1 // pred_check_branch
      %738 = sbr.rel (0) target = $region93
    $region92: #{tpu_custom_call.1} parent=1 // pred_region
      %739 = dma.done [#allocation16], 128
    $region93: #{tpu_custom_call.1} parent=1 // pred_fallthru
      _
    // Predicated region
    $region94: #{tpu_custom_call.1} parent=1 // pred_check
      _
    $region95: #{tpu_custom_call.1} parent=1 // pred_check_branch
      %741 = sbr.rel (0) target = $region97
    $region96: #{tpu_custom_call.1} parent=1 // pred_region
      %742 = dma.done [#allocation16], 256
    $region97: #{tpu_custom_call.1} parent=1 // pred_fallthru
      _
    %743 = vsyncpa [#allocation4], 1
    %744 = vsyncpa [#allocation7], 1
    %745 = vsyncpa [#allocation10], 1
    %746 = vsyncpa [#allocation13], 1
    %747 = vsyncpa [#allocation5], 1
    %748 = vsyncpa [#allocation16], 1

</llo_original>
